<compile_context>
chip_gen: v7x
topology: tpu7x:2x2x1
jax: 0.10.0
libtpu: 0.0.40
codegen_flags: <defaults>
</compile_context>

<pallas_src>
import functools
from typing import NamedTuple

import jax
import jax.numpy as jnp
from jax.experimental import pallas as pl
from jax.experimental.pallas import tpu as pltpu

_MIB = 1024 * 1024


# ---------------------------------------------------------------------------
# Hardware queries (robust to missing fields / non-TPU tracing)
# ---------------------------------------------------------------------------
def _tpu_vmem_capacity_bytes() -> int:
    try:
        return int(pltpu.get_tpu_info().vmem_capacity_bytes)
    except Exception:
        return 64 * _MIB  # conservative (v7x per-TensorCore)


def _num_tensorcores_per_chip() -> int:
    try:
        info = pltpu.get_tpu_info()
        for name in ("num_cores", "num_tensorcores", "tensorcores_per_chip",
                     "cores_per_chip"):
            v = getattr(info, name, None)
            if v:
                return int(v)
    except Exception:
        pass
    try:
        kind = (jax.devices()[0].device_kind or "").lower()
        if "v7" in kind:
            return 2
    except Exception:
        pass
    return 1


def _round_up(x: int, m: int) -> int:
    return ((x + m - 1) // m) * m


# ---------------------------------------------------------------------------
# One-time parameter preparation (hoisted out of the per-call path)
# ---------------------------------------------------------------------------
class ChebyKANParams(NamedTuple):
    coeffs_ko: jax.Array   # (degree * I_pad, O), degree-1..D slabs, zero-padded rows
    bias: jax.Array        # (1, O) float32 = sum_i coeffs[i, :, 0]  (T0 term)
    input_dim: int
    output_dim: int
    degree: int
    padded_dim: int        # I_pad = round_up(I, 128)


def prepare_chebykan_params(cheby_coeffs) -> ChebyKANParams:
    """Flatten/pad the (I, O, degree+1) coefficient tensor once.

    Keeps the caller's dtype for the matmul operand (bf16 stays bf16);
    the T0 bias is always float32.
    """
    input_dim, output_dim, deg_p1 = cheby_coeffs.shape
    degree = deg_p1 - 1

    bias = jnp.sum(cheby_coeffs[..., 0].astype(jnp.float32),
                   axis=0).reshape(1, output_dim)

    if degree == 0:
        coeffs_ko = jnp.zeros((0, output_dim), dtype=cheby_coeffs.dtype)
        return ChebyKANParams(coeffs_ko, bias, input_dim, output_dim, degree,
                              input_dim)

    # Lane-align each degree slab: pad I -> I_pad (multiple of 128) with zero
    # coefficient rows so the padded feature columns contribute nothing.
    padded_dim = _round_up(input_dim, 128)
    c = cheby_coeffs[..., 1:]                      # (I, O, degree)
    if padded_dim != input_dim:
        c = jnp.pad(c, ((0, padded_dim - input_dim), (0, 0), (0, 0)))
    coeffs_ko = jnp.transpose(c, (2, 0, 1)).reshape(degree * padded_dim,
                                                    output_dim)
    return ChebyKANParams(coeffs_ko, bias, input_dim, output_dim, degree,
                          padded_dim)


# ---------------------------------------------------------------------------
# Kernel
# ---------------------------------------------------------------------------
def _chebykan_kernel(x_ref, coeffs_ref, bias_ref, o_ref, feat_ref, *,
                     degree: int, input_dim: int, padded_dim: int):
    # x_ref:      (tb, I)            current batch tile
    # coeffs_ref: (degree*I_pad, to) current output-dim block of flat coeffs
    # bias_ref:   (1, to)            T0 bias block
    # o_ref:      (tb, to)
    # feat_ref:   (tb, degree*I_pad) VMEM scratch for stacked T_1..T_degree
    I, Ip = input_dim, padded_dim
    feat_dtype = feat_ref.dtype

    t = jnp.tanh(x_ref[...].astype(jnp.float32))            # (tb, I)
    if Ip != I:
        # Pad once so every slab store below is a dense, lane-aligned vst.
        # Padded columns multiply zero coefficient rows -> no effect on y.
        t = jnp.concatenate(
            [t, jnp.zeros((t.shape[0], Ip - I), jnp.float32)], axis=1)

    # d = 1 : T1 = t
    feat_ref[:, 0:Ip] = t.astype(feat_dtype)
    t_prev = jnp.ones_like(t)                                # T0
    t_cur = t
    t2 = t + t                                               # hoisted 2*t
    # d >= 2 : recurrence (static unroll; degree is small & static)
    for d in range(2, degree + 1):
        t_next = t2 * t_cur - t_prev
        feat_ref[:, (d - 1) * Ip: d * Ip] = t_next.astype(feat_dtype)
        t_prev, t_cur = t_cur, t_next

    # Single stacked-K matmul on the MXU, f32 accumulation.
    acc = jnp.dot(feat_ref[...], coeffs_ref[...],
                  preferred_element_type=jnp.float32)        # (tb, to)
    o_ref[...] = (acc + bias_ref[...]).astype(o_ref.dtype)


# ---------------------------------------------------------------------------
# Wrapper
# ---------------------------------------------------------------------------
def chebykan_forward(x, params, *, out_dtype=None):
    """ChebyKANLayer forward.

    x:      (..., input_dim) -- flattened like PyTorch's view(-1, I)
    params: ChebyKANParams (from prepare_chebykan_params) or the raw
            (input_dim, output_dim, degree+1) coefficient tensor.
    returns (prod(leading), output_dim) in `out_dtype` (default: x.dtype).
    """
    if not isinstance(params, ChebyKANParams):
        params = prepare_chebykan_params(params)

    input_dim = params.input_dim
    output_dim = params.output_dim
    degree = params.degree
    I_pad = params.padded_dim
    coeffs_ko = params.coeffs_ko
    bias = params.bias

    out_dtype = x.dtype if out_dtype is None else out_dtype
    x2 = x.reshape(-1, input_dim)
    batch = x2.shape[0]

    if degree == 0 or batch == 0:
        return jnp.broadcast_to(bias, (batch, output_dim)).astype(out_dtype)

    K = degree * I_pad
    cbytes = coeffs_ko.dtype.itemsize
    # bf16 coeffs -> bf16 features (fast MXU path); f32 coeffs -> f32 features.
    feat_dtype = jnp.bfloat16 if coeffs_ko.dtype == jnp.bfloat16 else jnp.float32
    feat_bytes = jnp.dtype(feat_dtype).itemsize
    out_bytes = jnp.dtype(out_dtype).itemsize
    x_bytes = x2.dtype.itemsize

    # ---- VMEM budgets derived from the chip (v7x: 64 MiB; v5e/v6e: 128 MiB) --
    vmem_cap = _tpu_vmem_capacity_bytes()
    vmem_limit = min(int(vmem_cap * 0.78), vmem_cap - 24 * _MIB)   # 128->100, 64->40 MiB
    vmem_limit = max(vmem_limit, 24 * _MIB)
    vmem_budget = max(vmem_limit - 12 * _MIB, 16 * _MIB)           # 128->88,  64->28 MiB
    coeff_thresh = int(vmem_budget * 0.45)                         # 128->~40, 64->~12 MiB

    # ---- output-dim tile (only tile if the coeff block is large) ------------
    coeff_hbm_bytes = K * output_dim * cbytes
    if output_dim <= 256 or 2 * coeff_hbm_bytes <= coeff_thresh:
        to = output_dim
    else:
        to = (coeff_thresh // (2 * K * cbytes)) // 256 * 256
        to = int(max(256, min(to, output_dim)))

    # ---- batch tile from the remaining VMEM budget ---------------------------
    def _tb_for(to_):
        per_row = (2 * input_dim * x_bytes        # x tile, double-buffered
                   + 2 * to_ * out_bytes          # out tile, double-buffered
                   + K * feat_bytes               # feature scratch
                   + 5 * I_pad * 4)               # f32 temporaries t,2t,T_{d-1},T_d,T_{d+1}
        coeff_resident = 2 * K * to_ * cbytes + 2 * to_ * 4
        avail = max(vmem_budget - coeff_resident, 8 * per_row)
        return min(int(avail // per_row), 2048)

    tb = _tb_for(to)
    # Prefer shrinking `to` (more coeff blocks, each DMA'd once) over letting
    # the batch tile fall below ~512 rows (per-step overhead / M-dim efficiency).
    while tb < 512 and to > 256:
        new_to = max(256, (to // 2 // 256) * 256)
        if new_to == to:
            break
        to = new_to
        tb = _tb_for(to)
    num_o = pl.cdiv(output_dim, to)

    num_tc = _num_tensorcores_per_chip()
    if tb >= batch:
        tb = batch
        if num_tc >= 2 and num_o == 1 and batch >= 16:
            # Keep >= 2 grid steps on the parallel axis so both v7x TCs work.
            half = (batch + 1) // 2
            tb = _round_up(half, 8)
    else:
        tb = max(8, (tb // 8) * 8)
    tb = int(min(tb, batch))
    num_b = pl.cdiv(batch, tb)

    kernel = functools.partial(_chebykan_kernel, degree=degree,
                               input_dim=input_dim, padded_dim=I_pad)

    rec_flops = batch * I_pad * (3 * max(degree - 1, 0) + 1)
    cost = pl.CostEstimate(
        flops=int(2 * batch * K * output_dim + rec_flops),
        transcendentals=int(batch * input_dim),                 # tanh
        bytes_accessed=int(x2.size * x_bytes
                           + coeffs_ko.size * cbytes
                           + bias.size * 4
                           + batch * output_dim * out_bytes),
    )

    out = pl.pallas_call(
        kernel,
        out_shape=jax.ShapeDtypeStruct((batch, output_dim), out_dtype),
        grid_spec=pltpu.PrefetchScalarGridSpec(
            num_scalar_prefetch=0,
            # Outer axis over output blocks (coeff block DMA'd once, resident
            # across the inner batch sweep), inner axis over batch tiles.
            grid=(num_o, num_b),
            in_specs=[
                pl.BlockSpec((tb, input_dim), lambda oi, bi: (bi, 0)),
                pl.BlockSpec((K, to), lambda oi, bi: (0, oi)),
                pl.BlockSpec((1, to), lambda oi, bi: (0, oi)),
            ],
            out_specs=pl.BlockSpec((tb, to), lambda oi, bi: (bi, oi)),
            scratch_shapes=[pltpu.VMEM((tb, K), feat_dtype)],
        ),
        compiler_params=pltpu.CompilerParams(
            dimension_semantics=("parallel", "parallel"),
            vmem_limit_bytes=int(vmem_limit)),
        cost_estimate=cost,
    )(x2, coeffs_ko, bias)
    return out


# ---------------------------------------------------------------------------
# Pure-JAX reference (literal translation of the PyTorch forward)
# ---------------------------------------------------------------------------
def chebykan_reference(x, cheby_coeffs):
    input_dim, output_dim, deg_p1 = cheby_coeffs.shape
    t = jnp.tanh(x.reshape(-1, input_dim)).astype(jnp.float32)
    ar = jnp.arange(deg_p1, dtype=jnp.float32)
    feats = jnp.cos(jnp.arccos(jnp.clip(t, -1.0, 1.0))[..., None] * ar)
    return jnp.einsum('bid,iod->bo', feats, cheby_coeffs.astype(jnp.float32))


if __name__ == "__main__":
    key = jax.random.PRNGKey(0)
    k_x, k_w = jax.random.split(key)

    batch = 8
    input_dim = 32
    output_dim = 16
    degree = 4

    # deterministic xavier_normal_-style init for cheby_coeffs (I, O, degree+1)
    fan_in = output_dim * (degree + 1)
    fan_out = input_dim * (degree + 1)
    std = (2.0 / (fan_in + fan_out)) ** 0.5
    cheby_coeffs = std * jax.random.normal(
        k_w, (input_dim, output_dim, degree + 1), dtype=jnp.float32)

    x = jax.random.normal(k_x, (batch, input_dim), dtype=jnp.float32)

    # One-time parameter preparation (hoisted out of the forward path).
    params = prepare_chebykan_params(cheby_coeffs)

    y = chebykan_forward(x, params, out_dtype=jnp.float32)
    y = jax.block_until_ready(y)

    y_ref = chebykan_reference(x, cheby_coeffs)
    assert y.shape == (batch, output_dim)
    assert jnp.allclose(y, y_ref, atol=1e-4, rtol=1e-4), "mismatch vs reference"

    print("KERNEL_OK")
</pallas_src>

<mosaic_0001>
module attributes {stable_mosaic.version = 11 : i64} {
  func.func @_chebykan_kernel(%arg0: i32, %arg1: i32, %arg2: memref<8x32xf32, #tpu.memory_space<vmem>>, %arg3: memref<512x16xf32, #tpu.memory_space<vmem>>, %arg4: memref<1x16xf32, #tpu.memory_space<vmem>>, %arg5: memref<8x16xf32, #tpu.memory_space<vmem>>, %arg6: memref<8x512xf32, #tpu.memory_space<vmem>>) attributes {dimension_semantics = [#tpu.dimension_semantics<parallel>, #tpu.dimension_semantics<parallel>], iteration_bounds = array<i64: 1, 1>, scalar_prefetch = 0 : i64, scratch_operands = 1 : i64, tpu.core_type = #tpu.core_type<tc>, window_params = [{transform_indices = @transform_0, window_bounds = array<i64: 8, 32>}, {transform_indices = @transform_1, window_bounds = array<i64: 512, 16>}, {transform_indices = @transform_2, window_bounds = array<i64: 1, 16>}, {transform_indices = @transform_3, window_bounds = array<i64: 8, 16>}]} {
    %c0 = arith.constant 0 : index
    %c0_0 = arith.constant 0 : index
    %0 = vector.load %arg2[%c0, %c0_0] : memref<8x32xf32, #tpu.memory_space<vmem>>, vector<8x32xf32>
    %1 = math.tanh %0 : vector<8x32xf32>
    %cst = arith.constant 0.000000e+00 : f32
    %2 = vector.broadcast %cst : f32 to vector<8x96xf32>
    %3 = tpu.concatenate %1, %2 in 1 : vector<8x32xf32>, vector<8x96xf32> -> vector<8x128xf32>
    %c0_1 = arith.constant 0 : index
    %c0_2 = arith.constant 0 : index
    %4 = vector.load %arg6[%c0_1, %c0_2] : memref<8x512xf32, #tpu.memory_space<vmem>>, vector<8x128xf32>
    tpu.vector_store %arg6[%c0_1, %c0_2], %3 {strides = array<i32>} : memref<8x512xf32, #tpu.memory_space<vmem>>, vector<8x128xf32>,
    %cst_3 = arith.constant 1.000000e+00 : f32
    %5 = vector.broadcast %cst_3 : f32 to vector<8x128xf32>
    %6 = arith.addf %3, %3 : vector<8x128xf32>
    %7 = arith.mulf %6, %3 : vector<8x128xf32>
    %8 = arith.subf %7, %5 : vector<8x128xf32>
    %c0_4 = arith.constant 0 : index
    %c128 = arith.constant 128 : index
    %9 = vector.load %arg6[%c0_4, %c128] : memref<8x512xf32, #tpu.memory_space<vmem>>, vector<8x128xf32>
    tpu.vector_store %arg6[%c0_4, %c128], %8 {strides = array<i32>} : memref<8x512xf32, #tpu.memory_space<vmem>>, vector<8x128xf32>,
    %10 = arith.mulf %6, %8 : vector<8x128xf32>
    %11 = arith.subf %10, %3 : vector<8x128xf32>
    %c0_5 = arith.constant 0 : index
    %c256 = arith.constant 256 : index
    %12 = vector.load %arg6[%c0_5, %c256] : memref<8x512xf32, #tpu.memory_space<vmem>>, vector<8x128xf32>
    tpu.vector_store %arg6[%c0_5, %c256], %11 {strides = array<i32>} : memref<8x512xf32, #tpu.memory_space<vmem>>, vector<8x128xf32>,
    %13 = arith.mulf %6, %11 : vector<8x128xf32>
    %14 = arith.subf %13, %8 : vector<8x128xf32>
    %c0_6 = arith.constant 0 : index
    %c384 = arith.constant 384 : index
    %15 = vector.load %arg6[%c0_6, %c384] : memref<8x512xf32, #tpu.memory_space<vmem>>, vector<8x128xf32>
    tpu.vector_store %arg6[%c0_6, %c384], %14 {strides = array<i32>} : memref<8x512xf32, #tpu.memory_space<vmem>>, vector<8x128xf32>,
    %c0_7 = arith.constant 0 : index
    %c0_8 = arith.constant 0 : index
    %16 = vector.load %arg6[%c0_7, %c0_8] : memref<8x512xf32, #tpu.memory_space<vmem>>, vector<8x512xf32>
    %c0_9 = arith.constant 0 : index
    %c0_10 = arith.constant 0 : index
    %17 = vector.load %arg3[%c0_9, %c0_10] : memref<512x16xf32, #tpu.memory_space<vmem>>, vector<512x16xf32>
    %cst_11 = arith.constant dense<0.000000e+00> : vector<8x16xf32>
    %18 = tpu.matmul %16, %17, %cst_11 {dimension_numbers = #tpu.dot_dimension_numbers<[1], [0], [0], [1], [0, 0, 1, 1], [], []>} : vector<8x512xf32>, vector<512x16xf32>, vector<8x16xf32> -> vector<8x16xf32>
    %c0_12 = arith.constant 0 : index
    %c0_13 = arith.constant 0 : index
    %19 = vector.load %arg4[%c0_12, %c0_13] : memref<1x16xf32, #tpu.memory_space<vmem>>, vector<1x16xf32>
    %20 = vector.broadcast %19 : vector<1x16xf32> to vector<8x16xf32>
    %21 = arith.addf %18, %20 : vector<8x16xf32>
    %c0_14 = arith.constant 0 : index
    %c0_15 = arith.constant 0 : index
    %22 = vector.load %arg5[%c0_14, %c0_15] : memref<8x16xf32, #tpu.memory_space<vmem>>, vector<8x16xf32>
    tpu.vector_store %arg5[%c0_14, %c0_15], %21 {strides = array<i32>} : memref<8x16xf32, #tpu.memory_space<vmem>>, vector<8x16xf32>,
    return
  }
  func.func @transform_0(%arg0: i32, %arg1: i32) -> (i32, i32) {
    %c0_i32 = arith.constant 0 : i32
    %c0_i32_0 = arith.constant 0 : i32
    return %arg1, %c0_i32 : i32, i32
  }
  func.func @transform_1(%arg0: i32, %arg1: i32) -> (i32, i32) {
    %c0_i32 = arith.constant 0 : i32
    %c0_i32_0 = arith.constant 0 : i32
    return %c0_i32, %arg0 : i32, i32
  }
  func.func @transform_2(%arg0: i32, %arg1: i32) -> (i32, i32) {
    %c0_i32 = arith.constant 0 : i32
    %c0_i32_0 = arith.constant 0 : i32
    return %c0_i32, %arg0 : i32, i32
  }
  func.func @transform_3(%arg0: i32, %arg1: i32) -> (i32, i32) {
    %c0_i32 = arith.constant 0 : i32
    return %arg1, %arg0 : i32, i32
  }
}

</mosaic_0001>

<llo_original>
// kernel: tpu_custom_call.1
$region0: #{tpu_custom_call.1}
  #allocation0 [shape = 'u32[]', space=smem, size = 0x4, offset = 0x4, fixed_abs, tag = 'smem constant byte address 0x4 - core index']
  #allocation1 [shape = 'u32[144,128]{1,0:T(1,128)}', space=vmem, size = 0x12000, scoped, tag = 'internal scratch']
  #allocation2 [shape = 'f32[8,512]{1,0:T(8,128)}', space=vmem, size = 0x4000, scoped, tag = 'scratch operand']
  %s0 = inlined_call_operand.vmem [shape: f32[8,32], index: 0, kind: input, shape index: {}]
  %s1 = inlined_call_operand.vmem [shape: f32[512,16], index: 1, kind: input, shape index: {}]
  %s2 = inlined_call_operand.vmem [shape: f32[1,16], index: 2, kind: input, shape index: {}]
  %s3 = inlined_call_operand.hbm [shape: f32[8,16], index: 3, kind: output, shape index: {}]
  %s4 = sld [smem:[#allocation0]]
  $region22: #{tpu_custom_call.1} parent=0
    _
  %s6 = ssub.s32 1, %s4
  %s7 = scalar_select 0, %s6, %s4
  $region1: #{tpu_custom_call.1} parent=0
    #allocation3 [shape = 'u8[4096]{0}', space=vmem, size = 0x1000, scoped, tag = 'output window, operand 0, single buffered']
    #allocation4 [shape = 's32[1]{0}', space=sflag, size = 0x4, scoped, tag = 'scoped memory for tpu_custom_call.1']
    %8 = vsyncpa [#allocation4], 0
    // Predicated region
    $region2: #{tpu_custom_call.1} parent=1 // pred_check
      _
    $region3: #{tpu_custom_call.1} parent=1 // pred_check_branch
      %10 = sbr.rel (0) target = $region5
    $region4: #{tpu_custom_call.1} parent=1 // pred_region
      _
    $region5: #{tpu_custom_call.1} parent=1 // pred_fallthru
      _
    // Predicated region
    $region6: #{tpu_custom_call.1} parent=1 // pred_check
      _
    $region7: #{tpu_custom_call.1} parent=1 // pred_check_branch
      %12 = sbr.rel (0) target = $region9
    $region8: #{tpu_custom_call.1} parent=1 // pred_region
      _
    $region9: #{tpu_custom_call.1} parent=1 // pred_fallthru
      _
    // Predicated region
    $region10: #{tpu_custom_call.1} parent=1 // pred_check
      _
    $region11: #{tpu_custom_call.1} parent=1 // pred_check_branch
      %14 = sbr.rel (0) target = $region13
    $region12: #{tpu_custom_call.1} parent=1 // pred_region
      _
    $region13: #{tpu_custom_call.1} parent=1 // pred_fallthru
      _
    %v15 = vld [vmem:[%s0] sm:$0xff]
    %v16 = vtanh.pop %v15
    %vm17 = vcmask 261120
    %v18 = vsel %vm17, %v16, 0.0
    %19 = vst [vmem:[#allocation2] sm:$0xff] %v18
    %v20 = vadd.f32 %v18, %v18
    %v21 = vmul.f32 %v20, %v18
    %v22 = vsub.f32 %v21, 1.0
    %23 = vst [vmem:[#allocation2 + $0x8] sm:$0xff] %v22
    %v24 = vmul.f32 %v20, %v22
    %v25 = vsub.f32 %v24, %v18
    %26 = vst [vmem:[#allocation2 + $0x10] sm:$0xff] %v25
    %v27 = vmul.f32 %v20, %v25
    %v28 = vsub.f32 %v27, %v22
    %29 = vst [vmem:[#allocation2 + $0x18] sm:$0xff] %v28
    %v30 = vld [vmem:[#allocation2] sm:$0xff]
    %v31 = vld [vmem:[#allocation2 + $0x8] sm:$0xff]
    %v32 = vld [vmem:[#allocation2 + $0x10] sm:$0xff]
    %v33 = vld [vmem:[#allocation2 + $0x18] sm:$0xff]
    %v34 = vld [vmem:[%s1] sm:$0xff]
    %v35 = vld [vmem:[%s1 + $0x8] sm:$0xff]
    %v36 = vld [vmem:[%s1 + $0x10] sm:$0xff]
    %v37 = vld [vmem:[%s1 + $0x18] sm:$0xff]
    %v38 = vld [vmem:[%s1 + $0x20] sm:$0xff]
    %v39 = vld [vmem:[%s1 + $0x28] sm:$0xff]
    %v40 = vld [vmem:[%s1 + $0x30] sm:$0xff]
    %v41 = vld [vmem:[%s1 + $0x38] sm:$0xff]
    %v42 = vld [vmem:[%s1 + $0x40] sm:$0xff]
    %v43 = vld [vmem:[%s1 + $0x48] sm:$0xff]
    %v44 = vld [vmem:[%s1 + $0x50] sm:$0xff]
    %v45 = vld [vmem:[%s1 + $0x58] sm:$0xff]
    %v46 = vld [vmem:[%s1 + $0x60] sm:$0xff]
    %v47 = vld [vmem:[%s1 + $0x68] sm:$0xff]
    %v48 = vld [vmem:[%s1 + $0x70] sm:$0xff]
    %v49 = vld [vmem:[%s1 + $0x78] sm:$0xff]
    %v50 = vld [vmem:[%s1 + $0x80] sm:$0xff]
    %v51 = vld [vmem:[%s1 + $0x88] sm:$0xff]
    %v52 = vld [vmem:[%s1 + $0x90] sm:$0xff]
    %v53 = vld [vmem:[%s1 + $0x98] sm:$0xff]
    %v54 = vld [vmem:[%s1 + $0xa0] sm:$0xff]
    %v55 = vld [vmem:[%s1 + $0xa8] sm:$0xff]
    %v56 = vld [vmem:[%s1 + $0xb0] sm:$0xff]
    %v57 = vld [vmem:[%s1 + $0xb8] sm:$0xff]
    %v58 = vld [vmem:[%s1 + $0xc0] sm:$0xff]
    %v59 = vld [vmem:[%s1 + $0xc8] sm:$0xff]
    %v60 = vld [vmem:[%s1 + $0xd0] sm:$0xff]
    %v61 = vld [vmem:[%s1 + $0xd8] sm:$0xff]
    %v62 = vld [vmem:[%s1 + $0xe0] sm:$0xff]
    %v63 = vld [vmem:[%s1 + $0xe8] sm:$0xff]
    %v64 = vld [vmem:[%s1 + $0xf0] sm:$0xff]
    %v65 = vld [vmem:[%s1 + $0xf8] sm:$0xff]
    %v66 = vld [vmem:[%s1 + $0x100] sm:$0xff]
    %v67 = vld [vmem:[%s1 + $0x108] sm:$0xff]
    %v68 = vld [vmem:[%s1 + $0x110] sm:$0xff]
    %v69 = vld [vmem:[%s1 + $0x118] sm:$0xff]
    %v70 = vld [vmem:[%s1 + $0x120] sm:$0xff]
    %v71 = vld [vmem:[%s1 + $0x128] sm:$0xff]
    %v72 = vld [vmem:[%s1 + $0x130] sm:$0xff]
    %v73 = vld [vmem:[%s1 + $0x138] sm:$0xff]
    %v74 = vld [vmem:[%s1 + $0x140] sm:$0xff]
    %v75 = vld [vmem:[%s1 + $0x148] sm:$0xff]
    %v76 = vld [vmem:[%s1 + $0x150] sm:$0xff]
    %v77 = vld [vmem:[%s1 + $0x158] sm:$0xff]
    %v78 = vld [vmem:[%s1 + $0x160] sm:$0xff]
    %v79 = vld [vmem:[%s1 + $0x168] sm:$0xff]
    %v80 = vld [vmem:[%s1 + $0x170] sm:$0xff]
    %v81 = vld [vmem:[%s1 + $0x178] sm:$0xff]
    %v82 = vld [vmem:[%s1 + $0x180] sm:$0xff]
    %v83 = vld [vmem:[%s1 + $0x188] sm:$0xff]
    %v84 = vld [vmem:[%s1 + $0x190] sm:$0xff]
    %v85 = vld [vmem:[%s1 + $0x198] sm:$0xff]
    %v86 = vld [vmem:[%s1 + $0x1a0] sm:$0xff]
    %v87 = vld [vmem:[%s1 + $0x1a8] sm:$0xff]
    %v88 = vld [vmem:[%s1 + $0x1b0] sm:$0xff]
    %v89 = vld [vmem:[%s1 + $0x1b8] sm:$0xff]
    %v90 = vld [vmem:[%s1 + $0x1c0] sm:$0xff]
    %v91 = vld [vmem:[%s1 + $0x1c8] sm:$0xff]
    %v92 = vld [vmem:[%s1 + $0x1d0] sm:$0xff]
    %v93 = vld [vmem:[%s1 + $0x1d8] sm:$0xff]
    %v94 = vld [vmem:[%s1 + $0x1e0] sm:$0xff]
    %v95 = vld [vmem:[%s1 + $0x1e8] sm:$0xff]
    %v96 = vld [vmem:[%s1 + $0x1f0] sm:$0xff]
    %v97 = vld [vmem:[%s1 + $0x1f8] sm:$0xff]
    %v98 = vld [vmem:[%s2] sm:$0x1]
    %v100 = vlaneseq
    %v101 = vshrl.u32 %v100, 7
    %v102 = vsub.s32 0, %v101
    %v103 = vrot.slane %v98, %v102
    %105 = vmatprep.subr.mxu0 0.0
    %106 = vmatpush1.msra.mxu0 %v34
    %107 = vmatprep.subr.mxu0 0.0
    %108 = vmatpush1.msra.mxu0 %v35
    %109 = vmatprep.subr.mxu0 0.0
    %110 = vmatpush1.msra.mxu0 %v36
    %111 = vmatprep.subr.mxu0 0.0
    %112 = vmatpush1.msra.mxu0 %v37
    %113 = vmatprep.subr.mxu0 0.0
    %114 = vmatpush1.msra.mxu0 %v38
    %115 = vmatprep.subr.mxu0 0.0
    %116 = vmatpush1.msra.mxu0 %v39
    %117 = vmatprep.subr.mxu0 0.0
    %118 = vmatpush1.msra.mxu0 %v40
    %119 = vmatprep.subr.mxu0 0.0
    %120 = vmatpush1.msra.mxu0 %v41
    %121 = vmatprep.subr.mxu0 0.0
    %122 = vmatpush1.msra.mxu0 %v42
    %123 = vmatprep.subr.mxu0 0.0
    %124 = vmatpush1.msra.mxu0 %v43
    %125 = vmatprep.subr.mxu0 0.0
    %126 = vmatpush1.msra.mxu0 %v44
    %127 = vmatprep.subr.mxu0 0.0
    %128 = vmatpush1.msra.mxu0 %v45
    %129 = vmatprep.subr.mxu0 0.0
    %130 = vmatpush1.msra.mxu0 %v46
    %131 = vmatprep.subr.mxu0 0.0
    %132 = vmatpush1.msra.mxu0 %v47
    %133 = vmatprep.subr.mxu0 0.0
    %134 = vmatpush1.msra.mxu0 %v48
    %135 = vmatprep.subr.mxu0 0.0
    %136 = vmatpush1.msra.mxu0 %v49
    %137 = vmatprep.subr.mxu0 0.0
    %138 = vmatpush1.msra.mxu0 %v50
    %139 = vmatprep.subr.mxu0 0.0
    %140 = vmatpush1.msra.mxu0 %v51
    %141 = vmatprep.subr.mxu0 0.0
    %142 = vmatpush1.msra.mxu0 %v52
    %143 = vmatprep.subr.mxu0 0.0
    %144 = vmatpush1.msra.mxu0 %v53
    %145 = vmatprep.subr.mxu0 0.0
    %146 = vmatpush1.msra.mxu0 %v54
    %147 = vmatprep.subr.mxu0 0.0
    %148 = vmatpush1.msra.mxu0 %v55
    %149 = vmatprep.subr.mxu0 0.0
    %150 = vmatpush1.msra.mxu0 %v56
    %151 = vmatprep.subr.mxu0 0.0
    %152 = vmatpush1.msra.mxu0 %v57
    %153 = vmatprep.subr.mxu0 0.0
    %154 = vmatpush1.msra.mxu0 %v58
    %155 = vmatprep.subr.mxu0 0.0
    %156 = vmatpush1.msra.mxu0 %v59
    %157 = vmatprep.subr.mxu0 0.0
    %158 = vmatpush1.msra.mxu0 %v60
    %159 = vmatprep.subr.mxu0 0.0
    %160 = vmatpush1.msra.mxu0 %v61
    %161 = vmatprep.subr.mxu0 0.0
    %162 = vmatpush1.msra.mxu0 %v62
    %163 = vmatprep.subr.mxu0 0.0
    %164 = vmatpush1.msra.mxu0 %v63
    %165 = vmatprep.subr.mxu0 0.0
    %166 = vmatpush1.msra.mxu0 %v64
    %167 = vmatprep.subr.mxu0 0.0
    %168 = vmatpush1.msra.mxu0 %v65
    %169 = vmatprep.mubr.f32.mxu0 %v31
    %170 = vmatmul.mubr.f32.gmra.mrb[0].mxu0 %v30
    %v171 = vpop.f32.mrb[0].mxu0
    %v172 = vadd.f32 %v103, %v171
    %v173 = vpop.f32.mrb[0].mxu0
    %174 = vdwg.mxu0
    %175 = vmatprep.subr.mxu0 0.0
    %176 = vmatpush1.msra.mxu0 %v66
    %177 = vmatprep.subr.mxu0 0.0
    %178 = vmatpush1.msra.mxu0 %v67
    %179 = vmatprep.subr.mxu0 0.0
    %180 = vmatpush1.msra.mxu0 %v68
    %181 = vmatprep.subr.mxu0 0.0
    %182 = vmatpush1.msra.mxu0 %v69
    %183 = vmatprep.subr.mxu0 0.0
    %184 = vmatpush1.msra.mxu0 %v70
    %185 = vmatprep.subr.mxu0 0.0
    %186 = vmatpush1.msra.mxu0 %v71
    %187 = vmatprep.subr.mxu0 0.0
    %188 = vmatpush1.msra.mxu0 %v72
    %189 = vmatprep.subr.mxu0 0.0
    %190 = vmatpush1.msra.mxu0 %v73
    %191 = vmatprep.subr.mxu0 0.0
    %192 = vmatpush1.msra.mxu0 %v74
    %193 = vmatprep.subr.mxu0 0.0
    %194 = vmatpush1.msra.mxu0 %v75
    %195 = vmatprep.subr.mxu0 0.0
    %196 = vmatpush1.msra.mxu0 %v76
    %197 = vmatprep.subr.mxu0 0.0
    %198 = vmatpush1.msra.mxu0 %v77
    %199 = vmatprep.subr.mxu0 0.0
    %200 = vmatpush1.msra.mxu0 %v78
    %201 = vmatprep.subr.mxu0 0.0
    %202 = vmatpush1.msra.mxu0 %v79
    %203 = vmatprep.subr.mxu0 0.0
    %204 = vmatpush1.msra.mxu0 %v80
    %205 = vmatprep.subr.mxu0 0.0
    %206 = vmatpush1.msra.mxu0 %v81
    %207 = vmatprep.subr.mxu0 0.0
    %208 = vmatpush1.msra.mxu0 %v82
    %209 = vmatprep.subr.mxu0 0.0
    %210 = vmatpush1.msra.mxu0 %v83
    %211 = vmatprep.subr.mxu0 0.0
    %212 = vmatpush1.msra.mxu0 %v84
    %213 = vmatprep.subr.mxu0 0.0
    %214 = vmatpush1.msra.mxu0 %v85
    %215 = vmatprep.subr.mxu0 0.0
    %216 = vmatpush1.msra.mxu0 %v86
    %217 = vmatprep.subr.mxu0 0.0
    %218 = vmatpush1.msra.mxu0 %v87
    %219 = vmatprep.subr.mxu0 0.0
    %220 = vmatpush1.msra.mxu0 %v88
    %221 = vmatprep.subr.mxu0 0.0
    %222 = vmatpush1.msra.mxu0 %v89
    %223 = vmatprep.subr.mxu0 0.0
    %224 = vmatpush1.msra.mxu0 %v90
    %225 = vmatprep.subr.mxu0 0.0
    %226 = vmatpush1.msra.mxu0 %v91
    %227 = vmatprep.subr.mxu0 0.0
    %228 = vmatpush1.msra.mxu0 %v92
    %229 = vmatprep.subr.mxu0 0.0
    %230 = vmatpush1.msra.mxu0 %v93
    %231 = vmatprep.subr.mxu0 0.0
    %232 = vmatpush1.msra.mxu0 %v94
    %233 = vmatprep.subr.mxu0 0.0
    %234 = vmatpush1.msra.mxu0 %v95
    %235 = vmatprep.subr.mxu0 0.0
    %236 = vmatpush1.msra.mxu0 %v96
    %237 = vmatprep.subr.mxu0 0.0
    %238 = vmatpush1.msra.mxu0 %v97
    %239 = vmatprep.mubr.f32.mxu0 %v33
    %240 = vmatmul.mubr.f32.gmra.mrb[0].mxu0 %v32
    %v241 = vpop.f32.mrb[0].mxu0
    %v242 = vadd.f32 %v172, %v241
    %v243 = vpop.f32.mrb[0].mxu0
    %244 = vdwg.mxu0
    %vm245 = vcmask 130048
    %246 = vst.msk [vmem:[#allocation3] sm:$0xff] %vm245, %v242
    // Predicated region
    $region14: #{tpu_custom_call.1} parent=1 // pred_check
      _
    $region15: #{tpu_custom_call.1} parent=1 // pred_check_branch
      %248 = sbr.rel (0) target = $region17
    $region16: #{tpu_custom_call.1} parent=1 // pred_region
      %s250 = ssub.s32 128, 128
      %251 = vsyncadd [#allocation4], %s250
      %s253 = sshll.u32 [#allocation3], 4
      %s254 = int_to_ptr.vmem [resolvable:$true] %s253
      %256 = dma.vmem_to_hbm [thread:$0]  %s254, 128, %s3, [#allocation4]
    $region17: #{tpu_custom_call.1} parent=1 // pred_fallthru
      _
    // Predicated region
    $region18: #{tpu_custom_call.1} parent=1 // pred_check
      _
    $region19: #{tpu_custom_call.1} parent=1 // pred_check_branch
      %258 = sbr.rel (0) target = $region21
    $region20: #{tpu_custom_call.1} parent=1 // pred_region
      %259 = dma.done [#allocation4], 128
    $region21: #{tpu_custom_call.1} parent=1 // pred_fallthru
      _
    %260 = vsyncpa [#allocation4], 1

</llo_original>
